<compile_context>
chip_gen: v6e
topology: v6e:2x2x1
jax: 0.10.0
libtpu: 0.0.40
codegen_flags: <defaults>
</compile_context>

<pallas_src>
import jax
import jax.numpy as jnp
from jax.experimental import pallas as pl
from jax.experimental.pallas import tpu as pltpu

IN_DIM, H_DIM, OUT_DIM = 2, 24, 3
PAD = 128        # padding of the hidden feature dim (sublanes, feature-major)
OUT_PAD = 8      # sublane padding for the 3-wide output
TILE_B = 1024    # batch columns per grid step for large batches
MIN_B = 128      # smallest (lane-dense) batch bucket


def mlp_kernel(x_ref, small_ref, w_ref, o_ref):
    # x_ref     : (2, tile)      feature-major input, batch in lanes
    # small_ref : (128, 8)       col 0-1 = W1^T columns, col 2 = b1,
    #                            col 3 = b2, col 4 = b3 (first 3 rows), rest 0
    # w_ref     : (2, 128, 128)  [0] = W2^T padded, [1] = W3^T padded
    # o_ref     : (8, tile)      rows 0-2 = logits, rows 3-7 junk (sliced off)
    xT = x_ref[...]                                   # (2, tile) f32
    s = small_ref[...]                                # (128, 8)

    # Layer 1 (K=2): two VPU FMAs, no MXU round trip.
    h1 = s[:, 0:1] * xT[0:1, :] + s[:, 1:2] * xT[1:2, :] + s[:, 2:3]   # + b1
    h1 = jnp.maximum(h1, 0.0)                         # (128, tile)

    # Layer 2: (128,128) x (128,tile) MXU matmul.
    h2 = jnp.dot(w_ref[0], h1, preferred_element_type=jnp.float32) + s[:, 3:4]
    h2 = jnp.maximum(h2, 0.0)

    # Layer 3: keep the MXU operand at full 128 width (v5e-friendly); slice after.
    y = jnp.dot(w_ref[1], h2, preferred_element_type=jnp.float32)
    # TODO(synk): nn.Dropout(0.2) is identity in eval mode (implemented here);
    # a train-mode path needs pltpu.prng_seed/prng_random_bits masking + 1/(1-p).
    o_ref[...] = y[:OUT_PAD, :] + s[:OUT_PAD, 4:5]    # + b3, lane-dense (8, tile)


def init_params(key):
    """Deterministic init mimicking PyTorch nn.Linear (uniform +-1/sqrt(fan_in))."""
    def linear(key, fan_in, fan_out):
        kw, kb = jax.random.split(key)
        bound = 1.0 / jnp.sqrt(jnp.asarray(fan_in, jnp.float32))
        w = jax.random.uniform(kw, (fan_in, fan_out), jnp.float32, -bound, bound)
        b = jax.random.uniform(kb, (fan_out,), jnp.float32, -bound, bound)
        return w, b

    k1, k2, k3 = jax.random.split(key, 3)
    return (
        linear(k1, IN_DIM, H_DIM),
        linear(k2, H_DIM, H_DIM),
        linear(k3, H_DIM, OUT_DIM),
    )


def pack_params(params):
    """Pad + pack parameters ONCE (feature-major / transposed); reuse every call."""
    (w1, b1), (w2, b2), (w3, b3) = params
    small = jnp.zeros((PAD, 8), jnp.float32)
    small = small.at[:H_DIM, 0].set(w1[0])            # W1^T column for x feature 0
    small = small.at[:H_DIM, 1].set(w1[1])            # W1^T column for x feature 1
    small = small.at[:H_DIM, 2].set(b1)
    small = small.at[:H_DIM, 3].set(b2)
    small = small.at[:OUT_DIM, 4].set(b3)
    wT = jnp.zeros((2, PAD, PAD), jnp.float32)
    wT = wT.at[0, :H_DIM, :H_DIM].set(w2.T)           # W2^T
    wT = wT.at[1, :OUT_DIM, :H_DIM].set(w3.T)         # W3^T
    return small, wT


def _bucket(B):
    """Bucket the padded batch width so varying B reuses few jit specializations."""
    if B <= TILE_B:
        Bp = max(MIN_B, 1 << max(0, (B - 1).bit_length()))   # next pow2, >=128
        return Bp, Bp, 1
    Bp = ((B + TILE_B - 1) // TILE_B) * TILE_B
    return Bp, TILE_B, Bp // TILE_B


def net_forward(x, packed):
    small, wT = packed
    B = x.shape[0]
    Bp, tile, steps = _bucket(B)

    xT = jnp.transpose(x.astype(jnp.float32))         # (2, B) feature-major
    if Bp != B:
        xT = jnp.pad(xT, ((0, 0), (0, Bp - B)))

    out = pl.pallas_call(
        mlp_kernel,
        out_shape=jax.ShapeDtypeStruct((OUT_PAD, Bp), jnp.float32),
        grid_spec=pltpu.PrefetchScalarGridSpec(
            num_scalar_prefetch=0,
            grid=(steps,),
            in_specs=[
                pl.BlockSpec((IN_DIM, tile), lambda i: (0, i)),    # x^T, lane-dense
                pl.BlockSpec((PAD, 8), lambda i: (0, 0)),          # W1^T cols + biases
                pl.BlockSpec((2, PAD, PAD), lambda i: (0, 0, 0)),  # W2^T, W3^T
            ],
            out_specs=pl.BlockSpec((OUT_PAD, tile), lambda i: (0, i)),  # (8, Bp) slab
        ),
        compiler_params=pltpu.CompilerParams(dimension_semantics=("parallel",)),
    )(xT, small, wT)

    # TODO(synk): for per-env-step inference (B~1..4) the call is dominated by the
    # fixed pallas_call + weight-DMA overhead; keeping the packed weights resident
    # across calls (cross-call prefetch) or letting XLA fuse the tiny MLP would be
    # the real latency win there.
    return jnp.transpose(out[:OUT_DIM, :B])           # (B, 3)


def reference_forward(x, params):
    (w1, b1), (w2, b2), (w3, b3) = params
    hp = jax.lax.Precision.HIGHEST
    h1 = jnp.maximum(jnp.dot(x, w1, precision=hp) + b1, 0.0)
    h2 = jnp.maximum(jnp.dot(h1, w2, precision=hp) + b2, 0.0)
    return jnp.dot(h2, w3, precision=hp) + b3  # dropout is identity in eval mode


if __name__ == "__main__":
    key = jax.random.PRNGKey(0)
    kx, kp = jax.random.split(key)

    params = init_params(kp)
    packed = pack_params(params)          # pad/pack once, outside the hot path
    fwd = jax.jit(net_forward)

    # MountainCar-v0 observation is 2-dimensional; small batch of 4.
    x_small = jax.random.normal(kx, (4, IN_DIM), jnp.float32)
    y = jax.block_until_ready(fwd(x_small, packed))
    y_ref = reference_forward(x_small, params)
    assert y.shape == (4, OUT_DIM), y.shape
    assert jnp.allclose(y, y_ref, atol=1e-4, rtol=1e-4), (y, y_ref)

    # Larger batch exercises the multi-step "parallel" batch grid (2 tiles of 1024).
    x_big = jax.random.normal(kx, (1200, IN_DIM), jnp.float32)
    y_big = jax.block_until_ready(fwd(x_big, packed))
    y_big_ref = reference_forward(x_big, params)
    assert y_big.shape == (1200, OUT_DIM), y_big.shape
    assert jnp.allclose(y_big, y_big_ref, atol=1e-4, rtol=1e-4)

    print("KERNEL_OK")
</pallas_src>

<mosaic_0001>
module attributes {stable_mosaic.version = 11 : i64} {
  func.func @mlp_kernel(%arg0: i32, %arg1: memref<2x128xf32, #tpu.memory_space<vmem>>, %arg2: memref<128x8xf32, #tpu.memory_space<vmem>>, %arg3: memref<2x128x128xf32, #tpu.memory_space<vmem>>, %arg4: memref<8x128xf32, #tpu.memory_space<vmem>>) attributes {dimension_semantics = [#tpu.dimension_semantics<parallel>], iteration_bounds = array<i64: 1>, scalar_prefetch = 0 : i64, scratch_operands = 0 : i64, tpu.core_type = #tpu.core_type<tc>, window_params = [{transform_indices = @transform_0, window_bounds = array<i64: 2, 128>}, {pipeline_mode = #tpu.pipeline_mode<synchronous>, transform_indices = @transform_1, window_bounds = array<i64: 128, 8>}, {pipeline_mode = #tpu.pipeline_mode<synchronous>, transform_indices = @transform_2, window_bounds = array<i64: 2, 128, 128>}, {transform_indices = @transform_3, window_bounds = array<i64: 8, 128>}]} {
    %c0 = arith.constant 0 : index
    %c0_0 = arith.constant 0 : index
    %0 = vector.load %arg1[%c0, %c0_0] : memref<2x128xf32, #tpu.memory_space<vmem>>, vector<2x128xf32>
    %c0_1 = arith.constant 0 : index
    %c0_2 = arith.constant 0 : index
    %1 = vector.load %arg2[%c0_1, %c0_2] : memref<128x8xf32, #tpu.memory_space<vmem>>, vector<128x8xf32>
    %2 = vector.extract_strided_slice %1 {offsets = [0, 0], sizes = [128, 1], strides = [1, 1]} : vector<128x8xf32> to vector<128x1xf32>
    %3 = vector.extract_strided_slice %0 {offsets = [0, 0], sizes = [1, 128], strides = [1, 1]} : vector<2x128xf32> to vector<1x128xf32>
    %4 = vector.broadcast %2 : vector<128x1xf32> to vector<128x128xf32>
    %5 = vector.broadcast %3 : vector<1x128xf32> to vector<128x128xf32>
    %6 = arith.mulf %4, %5 : vector<128x128xf32>
    %7 = vector.extract_strided_slice %1 {offsets = [0, 1], sizes = [128, 1], strides = [1, 1]} : vector<128x8xf32> to vector<128x1xf32>
    %8 = vector.extract_strided_slice %0 {offsets = [1, 0], sizes = [1, 128], strides = [1, 1]} : vector<2x128xf32> to vector<1x128xf32>
    %9 = vector.broadcast %7 : vector<128x1xf32> to vector<128x128xf32>
    %10 = vector.broadcast %8 : vector<1x128xf32> to vector<128x128xf32>
    %11 = arith.mulf %9, %10 : vector<128x128xf32>
    %12 = arith.addf %6, %11 : vector<128x128xf32>
    %13 = vector.extract_strided_slice %1 {offsets = [0, 2], sizes = [128, 1], strides = [1, 1]} : vector<128x8xf32> to vector<128x1xf32>
    %14 = vector.broadcast %13 : vector<128x1xf32> to vector<128x128xf32>
    %15 = arith.addf %12, %14 : vector<128x128xf32>
    %cst = arith.constant 0.000000e+00 : f32
    %16 = vector.broadcast %cst : f32 to vector<128x128xf32>
    %17 = arith.maximumf %15, %16 : vector<128x128xf32>
    %c0_3 = arith.constant 0 : index
    %c0_4 = arith.constant 0 : index
    %c0_5 = arith.constant 0 : index
    %18 = vector.load %arg3[%c0_3, %c0_4, %c0_5] : memref<2x128x128xf32, #tpu.memory_space<vmem>>, vector<1x128x128xf32>
    %19 = vector.shape_cast %18 : vector<1x128x128xf32> to vector<128x128xf32>
    %cst_6 = arith.constant dense<0.000000e+00> : vector<128x128xf32>
    %20 = tpu.matmul %19, %17, %cst_6 {dimension_numbers = #tpu.dot_dimension_numbers<[1], [0], [0], [1], [0, 0, 1, 1], [], []>} : vector<128x128xf32>, vector<128x128xf32>, vector<128x128xf32> -> vector<128x128xf32>
    %21 = vector.extract_strided_slice %1 {offsets = [0, 3], sizes = [128, 1], strides = [1, 1]} : vector<128x8xf32> to vector<128x1xf32>
    %22 = vector.broadcast %21 : vector<128x1xf32> to vector<128x128xf32>
    %23 = arith.addf %20, %22 : vector<128x128xf32>
    %cst_7 = arith.constant 0.000000e+00 : f32
    %24 = vector.broadcast %cst_7 : f32 to vector<128x128xf32>
    %25 = arith.maximumf %23, %24 : vector<128x128xf32>
    %c1 = arith.constant 1 : index
    %c0_8 = arith.constant 0 : index
    %c0_9 = arith.constant 0 : index
    %26 = vector.load %arg3[%c1, %c0_8, %c0_9] : memref<2x128x128xf32, #tpu.memory_space<vmem>>, vector<1x128x128xf32>
    %27 = vector.shape_cast %26 : vector<1x128x128xf32> to vector<128x128xf32>
    %cst_10 = arith.constant dense<0.000000e+00> : vector<128x128xf32>
    %28 = tpu.matmul %27, %25, %cst_10 {dimension_numbers = #tpu.dot_dimension_numbers<[1], [0], [0], [1], [0, 0, 1, 1], [], []>} : vector<128x128xf32>, vector<128x128xf32>, vector<128x128xf32> -> vector<128x128xf32>
    %29 = vector.extract_strided_slice %28 {offsets = [0, 0], sizes = [8, 128], strides = [1, 1]} : vector<128x128xf32> to vector<8x128xf32>
    %30 = vector.extract_strided_slice %1 {offsets = [0, 4], sizes = [8, 1], strides = [1, 1]} : vector<128x8xf32> to vector<8x1xf32>
    %31 = vector.broadcast %30 : vector<8x1xf32> to vector<8x128xf32>
    %32 = arith.addf %29, %31 : vector<8x128xf32>
    %c0_11 = arith.constant 0 : index
    %c0_12 = arith.constant 0 : index
    %33 = vector.load %arg4[%c0_11, %c0_12] : memref<8x128xf32, #tpu.memory_space<vmem>>, vector<8x128xf32>
    tpu.vector_store %arg4[%c0_11, %c0_12], %32 {strides = array<i32>} : memref<8x128xf32, #tpu.memory_space<vmem>>, vector<8x128xf32>,
    return
  }
  func.func @transform_0(%arg0: i32) -> (i32, i32) {
    %c0_i32 = arith.constant 0 : i32
    %c0_i32_0 = arith.constant 0 : i32
    return %c0_i32, %arg0 : i32, i32
  }
  func.func @transform_1(%arg0: i32) -> (i32, i32) {
    %c0_i32 = arith.constant 0 : i32
    %c0_i32_0 = arith.constant 0 : i32
    %c0_i32_1 = arith.constant 0 : i32
    return %c0_i32, %c0_i32_0 : i32, i32
  }
  func.func @transform_2(%arg0: i32) -> (i32, i32, i32) {
    %c0_i32 = arith.constant 0 : i32
    %c0_i32_0 = arith.constant 0 : i32
    %c0_i32_1 = arith.constant 0 : i32
    %c0_i32_2 = arith.constant 0 : i32
    return %c0_i32, %c0_i32_0, %c0_i32_1 : i32, i32, i32
  }
  func.func @transform_3(%arg0: i32) -> (i32, i32) {
    %c0_i32 = arith.constant 0 : i32
    %c0_i32_0 = arith.constant 0 : i32
    return %c0_i32, %arg0 : i32, i32
  }
}

</mosaic_0001>

<llo_original>
// kernel: net_forward.1
$region0: #{net_forward.1}
  #allocation0 [shape = 'u32[]', space=smem, size = 0x4, offset = 0x4, fixed_abs, tag = 'smem constant byte address 0x4 - core index']
  #allocation1 [shape = 'u32[144,128]{1,0:T(1,128)}', space=vmem, size = 0x12000, scoped, tag = 'internal scratch']
  %s0 = inlined_call_operand.vmem [shape: f32[2,128], index: 0, kind: input, shape index: {}]
  %s1 = inlined_call_operand.vmem [shape: f32[128,8], index: 1, kind: input, shape index: {}]
  %s2 = inlined_call_operand.hbm [shape: f32[2,128,128], index: 2, kind: input, shape index: {}]
  %s3 = inlined_call_operand.vmem [shape: f32[8,128], index: 3, kind: output, shape index: {}]
  %s4 = sld [smem:[#allocation0]]
  $region26: #{net_forward.1} parent=0
    _
  %s6 = ssub.s32 1, %s4
  %s7 = scalar_select 0, %s6, %s4
  $region1: #{net_forward.1} parent=0
    #allocation2 [shape = 'u8[131072]{0}', space=vmem, size = 0x20000, scoped, tag = 'input window, operand 2, single buffered']
    #allocation3 [shape = 's32[1]{0}', space=sflag, size = 0x4, scoped, tag = 'scoped memory for net_forward.1']
    %8 = vsyncpa [#allocation3], 0
    // Predicated region
    $region2: #{net_forward.1} parent=1 // pred_check
      _
    $region3: #{net_forward.1} parent=1 // pred_check_branch
      %10 = sbr.rel (0) target = $region5
    $region4: #{net_forward.1} parent=1 // pred_region
      _
    $region5: #{net_forward.1} parent=1 // pred_fallthru
      _
    // Predicated region
    $region6: #{net_forward.1} parent=1 // pred_check
      _
    $region7: #{net_forward.1} parent=1 // pred_check_branch
      %12 = sbr.rel (0) target = $region9
    $region8: #{net_forward.1} parent=1 // pred_region
      _
    $region9: #{net_forward.1} parent=1 // pred_fallthru
      _
    // Predicated region
    $region10: #{net_forward.1} parent=1 // pred_check
      _
    $region11: #{net_forward.1} parent=1 // pred_check_branch
      %14 = sbr.rel (0) target = $region13
    $region12: #{net_forward.1} parent=1 // pred_region
      %s16 = ssub.s32 4096, 4096
      %17 = vsyncadd [#allocation3], %s16
      %s18 = sshll.u32 [#allocation2], 4
      %s19 = int_to_ptr.vmem [resolvable:$true] %s18
      %24 = dma.hbm_to_vmem [thread:$0]  %s2, 4096, %s19, [#allocation3], 128, 128, 8
    $region13: #{net_forward.1} parent=1 // pred_fallthru
      _
    // Predicated region
    $region14: #{net_forward.1} parent=1 // pred_check
      _
    $region15: #{net_forward.1} parent=1 // pred_check_branch
      %26 = sbr.rel (0) target = $region17
    $region16: #{net_forward.1} parent=1 // pred_region
      %27 = dma.done [#allocation3], 4096
    $region17: #{net_forward.1} parent=1 // pred_fallthru
      _
    %v28 = vld [vmem:[%s0] sm:$0x3]
    %v29 = vld [vmem:[%s1] sm:$0xff]
    %v30 = vld [vmem:[%s1 + $0x8] sm:$0xff]
    %v31 = vld [vmem:[%s1 + $0x10] sm:$0xff]
    %v32 = vld [vmem:[%s1 + $0x18] sm:$0xff]
    %v33 = vld [vmem:[%s1 + $0x20] sm:$0xff]
    %v34 = vld [vmem:[%s1 + $0x28] sm:$0xff]
    %v35 = vld [vmem:[%s1 + $0x30] sm:$0xff]
    %v36 = vld [vmem:[%s1 + $0x38] sm:$0xff]
    %v37 = vld [vmem:[%s1 + $0x40] sm:$0xff]
    %v38 = vld [vmem:[%s1 + $0x48] sm:$0xff]
    %v39 = vld [vmem:[%s1 + $0x50] sm:$0xff]
    %v40 = vld [vmem:[%s1 + $0x58] sm:$0xff]
    %v41 = vld [vmem:[%s1 + $0x60] sm:$0xff]
    %v42 = vld [vmem:[%s1 + $0x68] sm:$0xff]
    %v43 = vld [vmem:[%s1 + $0x70] sm:$0xff]
    %v44 = vld [vmem:[%s1 + $0x78] sm:$0xff]
    %46 = vset.pattern.permute.xlu0 0
    %47 = vperm.xlu0 %46, %v29
    %v48 = vpop.permute.xlu0 %47
    %51 = vset.pattern.permute.xlu0 0
    %52 = vperm.xlu0 %51, %v30
    %v53 = vpop.permute.xlu0 %52
    %56 = vset.pattern.permute.xlu0 0
    %57 = vperm.xlu0 %56, %v31
    %v58 = vpop.permute.xlu0 %57
    %61 = vset.pattern.permute.xlu0 0
    %62 = vperm.xlu0 %61, %v32
    %v63 = vpop.permute.xlu0 %62
    %66 = vset.pattern.permute.xlu0 0
    %67 = vperm.xlu0 %66, %v33
    %v68 = vpop.permute.xlu0 %67
    %71 = vset.pattern.permute.xlu0 0
    %72 = vperm.xlu0 %71, %v34
    %v73 = vpop.permute.xlu0 %72
    %76 = vset.pattern.permute.xlu0 0
    %77 = vperm.xlu0 %76, %v35
    %v78 = vpop.permute.xlu0 %77
    %81 = vset.pattern.permute.xlu0 0
    %82 = vperm.xlu0 %81, %v36
    %v83 = vpop.permute.xlu0 %82
    %86 = vset.pattern.permute.xlu0 0
    %87 = vperm.xlu0 %86, %v37
    %v88 = vpop.permute.xlu0 %87
    %91 = vset.pattern.permute.xlu0 0
    %92 = vperm.xlu0 %91, %v38
    %v93 = vpop.permute.xlu0 %92
    %96 = vset.pattern.permute.xlu0 0
    %97 = vperm.xlu0 %96, %v39
    %v98 = vpop.permute.xlu0 %97
    %101 = vset.pattern.permute.xlu0 0
    %102 = vperm.xlu0 %101, %v40
    %v103 = vpop.permute.xlu0 %102
    %106 = vset.pattern.permute.xlu0 0
    %107 = vperm.xlu0 %106, %v41
    %v108 = vpop.permute.xlu0 %107
    %111 = vset.pattern.permute.xlu0 0
    %112 = vperm.xlu0 %111, %v42
    %v113 = vpop.permute.xlu0 %112
    %116 = vset.pattern.permute.xlu0 0
    %117 = vperm.xlu0 %116, %v43
    %v118 = vpop.permute.xlu0 %117
    %121 = vset.pattern.permute.xlu0 0
    %122 = vperm.xlu0 %121, %v44
    %v123 = vpop.permute.xlu0 %122
    %v125 = vlaneseq
    %v126 = vshrl.u32 %v125, 7
    %v127 = vsub.s32 0, %v126
    %v128 = vrot.slane %v28, %v127
    %v129 = vmul.f32 %v48, %v128
    %v130 = vmul.f32 %v53, %v128
    %v131 = vmul.f32 %v58, %v128
    %v132 = vmul.f32 %v63, %v128
    %v133 = vmul.f32 %v68, %v128
    %v134 = vmul.f32 %v73, %v128
    %v135 = vmul.f32 %v78, %v128
    %v136 = vmul.f32 %v83, %v128
    %v137 = vmul.f32 %v88, %v128
    %v138 = vmul.f32 %v93, %v128
    %v139 = vmul.f32 %v98, %v128
    %v140 = vmul.f32 %v103, %v128
    %v141 = vmul.f32 %v108, %v128
    %v142 = vmul.f32 %v113, %v128
    %v143 = vmul.f32 %v118, %v128
    %v144 = vmul.f32 %v123, %v128
    %145 = vset.pattern.permute.xlu0 1
    %146 = vperm.xlu0 %145, %v29
    %v147 = vpop.permute.xlu0 %146
    %149 = vset.pattern.permute.xlu0 1
    %150 = vperm.xlu0 %149, %v30
    %v151 = vpop.permute.xlu0 %150
    %153 = vset.pattern.permute.xlu0 1
    %154 = vperm.xlu0 %153, %v31
    %v155 = vpop.permute.xlu0 %154
    %157 = vset.pattern.permute.xlu0 1
    %158 = vperm.xlu0 %157, %v32
    %v159 = vpop.permute.xlu0 %158
    %161 = vset.pattern.permute.xlu0 1
    %162 = vperm.xlu0 %161, %v33
    %v163 = vpop.permute.xlu0 %162
    %165 = vset.pattern.permute.xlu0 1
    %166 = vperm.xlu0 %165, %v34
    %v167 = vpop.permute.xlu0 %166
    %169 = vset.pattern.permute.xlu0 1
    %170 = vperm.xlu0 %169, %v35
    %v171 = vpop.permute.xlu0 %170
    %173 = vset.pattern.permute.xlu0 1
    %174 = vperm.xlu0 %173, %v36
    %v175 = vpop.permute.xlu0 %174
    %177 = vset.pattern.permute.xlu0 1
    %178 = vperm.xlu0 %177, %v37
    %v179 = vpop.permute.xlu0 %178
    %181 = vset.pattern.permute.xlu0 1
    %182 = vperm.xlu0 %181, %v38
    %v183 = vpop.permute.xlu0 %182
    %185 = vset.pattern.permute.xlu0 1
    %186 = vperm.xlu0 %185, %v39
    %v187 = vpop.permute.xlu0 %186
    %189 = vset.pattern.permute.xlu0 1
    %190 = vperm.xlu0 %189, %v40
    %v191 = vpop.permute.xlu0 %190
    %193 = vset.pattern.permute.xlu0 1
    %194 = vperm.xlu0 %193, %v41
    %v195 = vpop.permute.xlu0 %194
    %197 = vset.pattern.permute.xlu0 1
    %198 = vperm.xlu0 %197, %v42
    %v199 = vpop.permute.xlu0 %198
    %201 = vset.pattern.permute.xlu0 1
    %202 = vperm.xlu0 %201, %v43
    %v203 = vpop.permute.xlu0 %202
    %205 = vset.pattern.permute.xlu0 1
    %206 = vperm.xlu0 %205, %v44
    %v207 = vpop.permute.xlu0 %206
    %v209 = vlaneseq
    %v210 = vshrl.u32 %v209, 7
    %v211 = vsub.s32 1, %v210
    %v212 = vrot.slane %v28, %v211
    %v213 = vmul.f32 %v147, %v212
    %v214 = vmul.f32 %v151, %v212
    %v215 = vmul.f32 %v155, %v212
    %v216 = vmul.f32 %v159, %v212
    %v217 = vmul.f32 %v163, %v212
    %v218 = vmul.f32 %v167, %v212
    %v219 = vmul.f32 %v171, %v212
    %v220 = vmul.f32 %v175, %v212
    %v221 = vmul.f32 %v179, %v212
    %v222 = vmul.f32 %v183, %v212
    %v223 = vmul.f32 %v187, %v212
    %v224 = vmul.f32 %v191, %v212
    %v225 = vmul.f32 %v195, %v212
    %v226 = vmul.f32 %v199, %v212
    %v227 = vmul.f32 %v203, %v212
    %v228 = vmul.f32 %v207, %v212
    %v229 = vadd.f32 %v129, %v213
    %v230 = vadd.f32 %v130, %v214
    %v231 = vadd.f32 %v131, %v215
    %v232 = vadd.f32 %v132, %v216
    %v233 = vadd.f32 %v133, %v217
    %v234 = vadd.f32 %v134, %v218
    %v235 = vadd.f32 %v135, %v219
    %v236 = vadd.f32 %v136, %v220
    %v237 = vadd.f32 %v137, %v221
    %v238 = vadd.f32 %v138, %v222
    %v239 = vadd.f32 %v139, %v223
    %v240 = vadd.f32 %v140, %v224
    %v241 = vadd.f32 %v141, %v225
    %v242 = vadd.f32 %v142, %v226
    %v243 = vadd.f32 %v143, %v227
    %v244 = vadd.f32 %v144, %v228
    %245 = vset.pattern.permute.xlu0 2
    %246 = vperm.xlu0 %245, %v29
    %v247 = vpop.permute.xlu0 %246
    %249 = vset.pattern.permute.xlu0 2
    %250 = vperm.xlu0 %249, %v30
    %v251 = vpop.permute.xlu0 %250
    %253 = vset.pattern.permute.xlu0 2
    %254 = vperm.xlu0 %253, %v31
    %v255 = vpop.permute.xlu0 %254
    %257 = vset.pattern.permute.xlu0 2
    %258 = vperm.xlu0 %257, %v32
    %v259 = vpop.permute.xlu0 %258
    %261 = vset.pattern.permute.xlu0 2
    %262 = vperm.xlu0 %261, %v33
    %v263 = vpop.permute.xlu0 %262
    %265 = vset.pattern.permute.xlu0 2
    %266 = vperm.xlu0 %265, %v34
    %v267 = vpop.permute.xlu0 %266
    %269 = vset.pattern.permute.xlu0 2
    %270 = vperm.xlu0 %269, %v35
    %v271 = vpop.permute.xlu0 %270
    %273 = vset.pattern.permute.xlu0 2
    %274 = vperm.xlu0 %273, %v36
    %v275 = vpop.permute.xlu0 %274
    %277 = vset.pattern.permute.xlu0 2
    %278 = vperm.xlu0 %277, %v37
    %v279 = vpop.permute.xlu0 %278
    %281 = vset.pattern.permute.xlu0 2
    %282 = vperm.xlu0 %281, %v38
    %v283 = vpop.permute.xlu0 %282
    %285 = vset.pattern.permute.xlu0 2
    %286 = vperm.xlu0 %285, %v39
    %v287 = vpop.permute.xlu0 %286
    %289 = vset.pattern.permute.xlu0 2
    %290 = vperm.xlu0 %289, %v40
    %v291 = vpop.permute.xlu0 %290
    %293 = vset.pattern.permute.xlu0 2
    %294 = vperm.xlu0 %293, %v41
    %v295 = vpop.permute.xlu0 %294
    %297 = vset.pattern.permute.xlu0 2
    %298 = vperm.xlu0 %297, %v42
    %v299 = vpop.permute.xlu0 %298
    %301 = vset.pattern.permute.xlu0 2
    %302 = vperm.xlu0 %301, %v43
    %v303 = vpop.permute.xlu0 %302
    %305 = vset.pattern.permute.xlu0 2
    %306 = vperm.xlu0 %305, %v44
    %v307 = vpop.permute.xlu0 %306
    %v309 = vadd.f32 %v229, %v247
    %v310 = vadd.f32 %v230, %v251
    %v311 = vadd.f32 %v231, %v255
    %v312 = vadd.f32 %v232, %v259
    %v313 = vadd.f32 %v233, %v263
    %v314 = vadd.f32 %v234, %v267
    %v315 = vadd.f32 %v235, %v271
    %v316 = vadd.f32 %v236, %v275
    %v317 = vadd.f32 %v237, %v279
    %v318 = vadd.f32 %v238, %v283
    %v319 = vadd.f32 %v239, %v287
    %v320 = vadd.f32 %v240, %v291
    %v321 = vadd.f32 %v241, %v295
    %v322 = vadd.f32 %v242, %v299
    %v323 = vadd.f32 %v243, %v303
    %v324 = vadd.f32 %v244, %v307
    %v325 = vmax.f32 %v309, 0.0
    %v326 = vmax.f32 %v310, 0.0
    %v327 = vmax.f32 %v311, 0.0
    %v328 = vmax.f32 %v312, 0.0
    %v329 = vmax.f32 %v313, 0.0
    %v330 = vmax.f32 %v314, 0.0
    %v331 = vmax.f32 %v315, 0.0
    %v332 = vmax.f32 %v316, 0.0
    %v333 = vmax.f32 %v317, 0.0
    %v334 = vmax.f32 %v318, 0.0
    %v335 = vmax.f32 %v319, 0.0
    %v336 = vmax.f32 %v320, 0.0
    %v337 = vmax.f32 %v321, 0.0
    %v338 = vmax.f32 %v322, 0.0
    %v339 = vmax.f32 %v323, 0.0
    %v340 = vmax.f32 %v324, 0.0
    %v341 = vld [vmem:[#allocation2] sm:$0xff]
    %v342 = vld [vmem:[#allocation2 + $0x8] sm:$0xff]
    %v343 = vld [vmem:[#allocation2 + $0x10] sm:$0xff]
    %v344 = vld [vmem:[#allocation2 + $0x18] sm:$0xff]
    %v345 = vld [vmem:[#allocation2 + $0x20] sm:$0xff]
    %v346 = vld [vmem:[#allocation2 + $0x28] sm:$0xff]
    %v347 = vld [vmem:[#allocation2 + $0x30] sm:$0xff]
    %v348 = vld [vmem:[#allocation2 + $0x38] sm:$0xff]
    %v349 = vld [vmem:[#allocation2 + $0x40] sm:$0xff]
    %v350 = vld [vmem:[#allocation2 + $0x48] sm:$0xff]
    %v351 = vld [vmem:[#allocation2 + $0x50] sm:$0xff]
    %v352 = vld [vmem:[#allocation2 + $0x58] sm:$0xff]
    %v353 = vld [vmem:[#allocation2 + $0x60] sm:$0xff]
    %v354 = vld [vmem:[#allocation2 + $0x68] sm:$0xff]
    %v355 = vld [vmem:[#allocation2 + $0x70] sm:$0xff]
    %v356 = vld [vmem:[#allocation2 + $0x78] sm:$0xff]
    %357 = vset.pattern.permute.xlu0 3
    %358 = vperm.xlu0 %357, %v29
    %v359 = vpop.permute.xlu0 %358
    %361 = vset.pattern.permute.xlu0 3
    %362 = vperm.xlu0 %361, %v30
    %v363 = vpop.permute.xlu0 %362
    %365 = vset.pattern.permute.xlu0 3
    %366 = vperm.xlu0 %365, %v31
    %v367 = vpop.permute.xlu0 %366
    %369 = vset.pattern.permute.xlu0 3
    %370 = vperm.xlu0 %369, %v32
    %v371 = vpop.permute.xlu0 %370
    %373 = vset.pattern.permute.xlu0 3
    %374 = vperm.xlu0 %373, %v33
    %v375 = vpop.permute.xlu0 %374
    %377 = vset.pattern.permute.xlu0 3
    %378 = vperm.xlu0 %377, %v34
    %v379 = vpop.permute.xlu0 %378
    %381 = vset.pattern.permute.xlu0 3
    %382 = vperm.xlu0 %381, %v35
    %v383 = vpop.permute.xlu0 %382
    %385 = vset.pattern.permute.xlu0 3
    %386 = vperm.xlu0 %385, %v36
    %v387 = vpop.permute.xlu0 %386
    %389 = vset.pattern.permute.xlu0 3
    %390 = vperm.xlu0 %389, %v37
    %v391 = vpop.permute.xlu0 %390
    %393 = vset.pattern.permute.xlu0 3
    %394 = vperm.xlu0 %393, %v38
    %v395 = vpop.permute.xlu0 %394
    %397 = vset.pattern.permute.xlu0 3
    %398 = vperm.xlu0 %397, %v39
    %v399 = vpop.permute.xlu0 %398
    %401 = vset.pattern.permute.xlu0 3
    %402 = vperm.xlu0 %401, %v40
    %v403 = vpop.permute.xlu0 %402
    %405 = vset.pattern.permute.xlu0 3
    %406 = vperm.xlu0 %405, %v41
    %v407 = vpop.permute.xlu0 %406
    %409 = vset.pattern.permute.xlu0 3
    %410 = vperm.xlu0 %409, %v42
    %v411 = vpop.permute.xlu0 %410
    %413 = vset.pattern.permute.xlu0 3
    %414 = vperm.xlu0 %413, %v43
    %v415 = vpop.permute.xlu0 %414
    %417 = vset.pattern.permute.xlu0 3
    %418 = vperm.xlu0 %417, %v44
    %v419 = vpop.permute.xlu0 %418
    %421 = vmatprep.subr.mxu0 0.0
    %422 = vmatpush1.msra.mxu0 %v340
    %423 = vmatprep.subr.mxu0 0.0
    %424 = vmatpush1.msra.mxu0 %v339
    %425 = vmatprep.subr.mxu0 0.0
    %426 = vmatpush1.msra.mxu0 %v338
    %427 = vmatprep.subr.mxu0 0.0
    %428 = vmatpush1.msra.mxu0 %v337
    %429 = vmatprep.subr.mxu0 0.0
    %430 = vmatpush1.msra.mxu0 %v336
    %431 = vmatprep.subr.mxu0 0.0
    %432 = vmatpush1.msra.mxu0 %v335
    %433 = vmatprep.subr.mxu0 0.0
    %434 = vmatpush1.msra.mxu0 %v334
    %435 = vmatprep.subr.mxu0 0.0
    %436 = vmatpush1.msra.mxu0 %v333
    %437 = vmatprep.subr.mxu0 0.0
    %438 = vmatpush1.msra.mxu0 %v332
    %439 = vmatprep.subr.mxu0 0.0
    %440 = vmatpush1.msra.mxu0 %v331
    %441 = vmatprep.subr.mxu0 0.0
    %442 = vmatpush1.msra.mxu0 %v330
    %443 = vmatprep.subr.mxu0 0.0
    %444 = vmatpush1.msra.mxu0 %v329
    %445 = vmatprep.subr.mxu0 0.0
    %446 = vmatpush1.msra.mxu0 %v328
    %447 = vmatprep.subr.mxu0 0.0
    %448 = vmatpush1.msra.mxu0 %v327
    %449 = vmatprep.subr.mxu0 0.0
    %450 = vmatpush1.msra.mxu0 %v326
    %451 = vmatprep.subr.mxu0 0.0
    %452 = vmatpush1.msra.mxu0 %v325
    %453 = vmatprep.subr.mxu0 0.0
    %454 = vmatpush2.msra.mxu0 0.0
    %455 = vmatprep.subr.mxu0 0.0
    %456 = vmatpush2.msra.mxu0 0.0
    %457 = vmatprep.subr.mxu0 0.0
    %458 = vmatpush2.msra.mxu0 0.0
    %459 = vmatprep.subr.mxu0 0.0
    %460 = vmatpush2.msra.mxu0 0.0
    %461 = vmatprep.subr.mxu0 0.0
    %462 = vmatpush2.msra.mxu0 0.0
    %463 = vmatprep.subr.mxu0 0.0
    %464 = vmatpush2.msra.mxu0 0.0
    %465 = vmatprep.subr.mxu0 0.0
    %466 = vmatpush2.msra.mxu0 0.0
    %467 = vmatprep.subr.mxu0 0.0
    %468 = vmatpush2.msra.mxu0 0.0
    %469 = vmatprep.subr.mxu0 0.0
    %470 = vmatpush2.msra.mxu0 0.0
    %471 = vmatprep.subr.mxu0 0.0
    %472 = vmatpush2.msra.mxu0 0.0
    %473 = vmatprep.subr.mxu0 0.0
    %474 = vmatpush2.msra.mxu0 0.0
    %475 = vmatprep.subr.mxu0 0.0
    %476 = vmatpush2.msra.mxu0 0.0
    %477 = vmatprep.subr.mxu0 0.0
    %478 = vmatpush2.msra.mxu0 0.0
    %479 = vmatprep.subr.mxu0 0.0
    %480 = vmatpush2.msra.mxu0 0.0
    %481 = vmatprep.subr.mxu0 0.0
    %482 = vmatpush2.msra.mxu0 0.0
    %483 = vmatprep.subr.mxu0 0.0
    %484 = vmatpush2.msra.mxu0 0.0
    %485 = vmatprep.mubr.f32.mxu0 0.0
    %486 = vmatmul.mubr.f32.gmra.mxu0 %v341
    %v487 = vpop.f32.mrf.mxu0
    %v488 = vadd.f32 %v359, %v487
    %v489 = vpop.f32.mrf.mxu0
    %490 = vmatprep.mubr.f32.mxu0 0.0
    %491 = vmatmul.mubr.f32.gmra.mxu0 %v342
    %v492 = vpop.f32.mrf.mxu0
    %v493 = vadd.f32 %v363, %v492
    %v494 = vpop.f32.mrf.mxu0
    %495 = vmatprep.mubr.f32.mxu0 0.0
    %496 = vmatmul.mubr.f32.gmra.mxu0 %v343
    %v497 = vpop.f32.mrf.mxu0
    %v498 = vadd.f32 %v367, %v497
    %v499 = vpop.f32.mrf.mxu0
    %500 = vmatprep.mubr.f32.mxu0 0.0
    %501 = vmatmul.mubr.f32.gmra.mxu0 %v344
    %v502 = vpop.f32.mrf.mxu0
    %v503 = vadd.f32 %v371, %v502
    %v504 = vpop.f32.mrf.mxu0
    %505 = vmatprep.mubr.f32.mxu0 0.0
    %506 = vmatmul.mubr.f32.gmra.mxu0 %v345
    %v507 = vpop.f32.mrf.mxu0
    %v508 = vadd.f32 %v375, %v507
    %v509 = vpop.f32.mrf.mxu0
    %510 = vmatprep.mubr.f32.mxu0 0.0
    %511 = vmatmul.mubr.f32.gmra.mxu0 %v346
    %v512 = vpop.f32.mrf.mxu0
    %v513 = vadd.f32 %v379, %v512
    %v514 = vpop.f32.mrf.mxu0
    %515 = vmatprep.mubr.f32.mxu0 0.0
    %516 = vmatmul.mubr.f32.gmra.mxu0 %v347
    %v517 = vpop.f32.mrf.mxu0
    %v518 = vadd.f32 %v383, %v517
    %v519 = vpop.f32.mrf.mxu0
    %520 = vmatprep.mubr.f32.mxu0 0.0
    %521 = vmatmul.mubr.f32.gmra.mxu0 %v348
    %v522 = vpop.f32.mrf.mxu0
    %v523 = vadd.f32 %v387, %v522
    %v524 = vpop.f32.mrf.mxu0
    %525 = vmatprep.mubr.f32.mxu0 0.0
    %526 = vmatmul.mubr.f32.gmra.mxu0 %v349
    %v527 = vpop.f32.mrf.mxu0
    %v528 = vadd.f32 %v391, %v527
    %v529 = vpop.f32.mrf.mxu0
    %530 = vmatprep.mubr.f32.mxu0 0.0
    %531 = vmatmul.mubr.f32.gmra.mxu0 %v350
    %v532 = vpop.f32.mrf.mxu0
    %v533 = vadd.f32 %v395, %v532
    %v534 = vpop.f32.mrf.mxu0
    %535 = vmatprep.mubr.f32.mxu0 0.0
    %536 = vmatmul.mubr.f32.gmra.mxu0 %v351
    %v537 = vpop.f32.mrf.mxu0
    %v538 = vadd.f32 %v399, %v537
    %v539 = vpop.f32.mrf.mxu0
    %540 = vmatprep.mubr.f32.mxu0 0.0
    %541 = vmatmul.mubr.f32.gmra.mxu0 %v352
    %v542 = vpop.f32.mrf.mxu0
    %v543 = vadd.f32 %v403, %v542
    %v544 = vpop.f32.mrf.mxu0
    %545 = vmatprep.mubr.f32.mxu0 0.0
    %546 = vmatmul.mubr.f32.gmra.mxu0 %v353
    %v547 = vpop.f32.mrf.mxu0
    %v548 = vadd.f32 %v407, %v547
    %v549 = vpop.f32.mrf.mxu0
    %550 = vmatprep.mubr.f32.mxu0 0.0
    %551 = vmatmul.mubr.f32.gmra.mxu0 %v354
    %v552 = vpop.f32.mrf.mxu0
    %v553 = vadd.f32 %v411, %v552
    %v554 = vpop.f32.mrf.mxu0
    %555 = vmatprep.mubr.f32.mxu0 0.0
    %556 = vmatmul.mubr.f32.gmra.mxu0 %v355
    %v557 = vpop.f32.mrf.mxu0
    %v558 = vadd.f32 %v415, %v557
    %v559 = vpop.f32.mrf.mxu0
    %560 = vmatprep.mubr.f32.mxu0 0.0
    %561 = vmatmul.mubr.f32.gmra.mxu0 %v356
    %v562 = vpop.f32.mrf.mxu0
    %v563 = vadd.f32 %v419, %v562
    %v564 = vpop.f32.mrf.mxu0
    %565 = vdwg.mxu0
    %v566 = vmax.f32 %v488, 0.0
    %v567 = vmax.f32 %v493, 0.0
    %v568 = vmax.f32 %v498, 0.0
    %v569 = vmax.f32 %v503, 0.0
    %v570 = vmax.f32 %v508, 0.0
    %v571 = vmax.f32 %v513, 0.0
    %v572 = vmax.f32 %v518, 0.0
    %v573 = vmax.f32 %v523, 0.0
    %v574 = vmax.f32 %v528, 0.0
    %v575 = vmax.f32 %v533, 0.0
    %v576 = vmax.f32 %v538, 0.0
    %v577 = vmax.f32 %v543, 0.0
    %v578 = vmax.f32 %v548, 0.0
    %v579 = vmax.f32 %v553, 0.0
    %v580 = vmax.f32 %v558, 0.0
    %v581 = vmax.f32 %v563, 0.0
    %s582 = scalar_lea.vmem [#allocation2], 128
    %v583 = vld [vmem:[%s582] sm:$0xff]
    %v584 = vld [vmem:[%s582 + $0x8] sm:$0xff]
    %v585 = vld [vmem:[%s582 + $0x10] sm:$0xff]
    %v586 = vld [vmem:[%s582 + $0x18] sm:$0xff]
    %v587 = vld [vmem:[%s582 + $0x20] sm:$0xff]
    %v588 = vld [vmem:[%s582 + $0x28] sm:$0xff]
    %v589 = vld [vmem:[%s582 + $0x30] sm:$0xff]
    %v590 = vld [vmem:[%s582 + $0x38] sm:$0xff]
    %v591 = vld [vmem:[%s582 + $0x40] sm:$0xff]
    %v592 = vld [vmem:[%s582 + $0x48] sm:$0xff]
    %v593 = vld [vmem:[%s582 + $0x50] sm:$0xff]
    %v594 = vld [vmem:[%s582 + $0x58] sm:$0xff]
    %v595 = vld [vmem:[%s582 + $0x60] sm:$0xff]
    %v596 = vld [vmem:[%s582 + $0x68] sm:$0xff]
    %v597 = vld [vmem:[%s582 + $0x70] sm:$0xff]
    %v598 = vld [vmem:[%s582 + $0x78] sm:$0xff]
    %599 = vmatprep.subr.mxu0 0.0
    %600 = vmatpush1.msra.mxu0 %v581
    %601 = vmatprep.subr.mxu0 0.0
    %602 = vmatpush1.msra.mxu0 %v580
    %603 = vmatprep.subr.mxu0 0.0
    %604 = vmatpush1.msra.mxu0 %v579
    %605 = vmatprep.subr.mxu0 0.0
    %606 = vmatpush1.msra.mxu0 %v578
    %607 = vmatprep.subr.mxu0 0.0
    %608 = vmatpush1.msra.mxu0 %v577
    %609 = vmatprep.subr.mxu0 0.0
    %610 = vmatpush1.msra.mxu0 %v576
    %611 = vmatprep.subr.mxu0 0.0
    %612 = vmatpush1.msra.mxu0 %v575
    %613 = vmatprep.subr.mxu0 0.0
    %614 = vmatpush1.msra.mxu0 %v574
    %615 = vmatprep.subr.mxu0 0.0
    %616 = vmatpush1.msra.mxu0 %v573
    %617 = vmatprep.subr.mxu0 0.0
    %618 = vmatpush1.msra.mxu0 %v572
    %619 = vmatprep.subr.mxu0 0.0
    %620 = vmatpush1.msra.mxu0 %v571
    %621 = vmatprep.subr.mxu0 0.0
    %622 = vmatpush1.msra.mxu0 %v570
    %623 = vmatprep.subr.mxu0 0.0
    %624 = vmatpush1.msra.mxu0 %v569
    %625 = vmatprep.subr.mxu0 0.0
    %626 = vmatpush1.msra.mxu0 %v568
    %627 = vmatprep.subr.mxu0 0.0
    %628 = vmatpush1.msra.mxu0 %v567
    %629 = vmatprep.subr.mxu0 0.0
    %630 = vmatpush1.msra.mxu0 %v566
    %631 = vmatprep.subr.mxu0 0.0
    %632 = vmatpush2.msra.mxu0 0.0
    %633 = vmatprep.subr.mxu0 0.0
    %634 = vmatpush2.msra.mxu0 0.0
    %635 = vmatprep.subr.mxu0 0.0
    %636 = vmatpush2.msra.mxu0 0.0
    %637 = vmatprep.subr.mxu0 0.0
    %638 = vmatpush2.msra.mxu0 0.0
    %639 = vmatprep.subr.mxu0 0.0
    %640 = vmatpush2.msra.mxu0 0.0
    %641 = vmatprep.subr.mxu0 0.0
    %642 = vmatpush2.msra.mxu0 0.0
    %643 = vmatprep.subr.mxu0 0.0
    %644 = vmatpush2.msra.mxu0 0.0
    %645 = vmatprep.subr.mxu0 0.0
    %646 = vmatpush2.msra.mxu0 0.0
    %647 = vmatprep.subr.mxu0 0.0
    %648 = vmatpush2.msra.mxu0 0.0
    %649 = vmatprep.subr.mxu0 0.0
    %650 = vmatpush2.msra.mxu0 0.0
    %651 = vmatprep.subr.mxu0 0.0
    %652 = vmatpush2.msra.mxu0 0.0
    %653 = vmatprep.subr.mxu0 0.0
    %654 = vmatpush2.msra.mxu0 0.0
    %655 = vmatprep.subr.mxu0 0.0
    %656 = vmatpush2.msra.mxu0 0.0
    %657 = vmatprep.subr.mxu0 0.0
    %658 = vmatpush2.msra.mxu0 0.0
    %659 = vmatprep.subr.mxu0 0.0
    %660 = vmatpush2.msra.mxu0 0.0
    %661 = vmatprep.subr.mxu0 0.0
    %662 = vmatpush2.msra.mxu0 0.0
    %663 = vmatprep.mubr.f32.mxu0 0.0
    %664 = vmatmul.mubr.f32.gmra.mxu0 %v583
    %v665 = vpop.f32.mrf.mxu0
    %v666 = vadd.f32 0.0, %v665
    %v667 = vpop.f32.mrf.mxu0
    %668 = vmatprep.mubr.f32.mxu0 0.0
    %669 = vmatmul.mubr.f32.gmra.mxu0 %v584
    %v670 = vpop.f32.mrf.mxu0
    %v671 = vpop.f32.mrf.mxu0
    %672 = vmatprep.mubr.f32.mxu0 0.0
    %673 = vmatmul.mubr.f32.gmra.mxu0 %v585
    %v674 = vpop.f32.mrf.mxu0
    %v675 = vpop.f32.mrf.mxu0
    %676 = vmatprep.mubr.f32.mxu0 0.0
    %677 = vmatmul.mubr.f32.gmra.mxu0 %v586
    %v678 = vpop.f32.mrf.mxu0
    %v679 = vpop.f32.mrf.mxu0
    %680 = vmatprep.mubr.f32.mxu0 0.0
    %681 = vmatmul.mubr.f32.gmra.mxu0 %v587
    %v682 = vpop.f32.mrf.mxu0
    %v683 = vpop.f32.mrf.mxu0
    %684 = vmatprep.mubr.f32.mxu0 0.0
    %685 = vmatmul.mubr.f32.gmra.mxu0 %v588
    %v686 = vpop.f32.mrf.mxu0
    %v687 = vpop.f32.mrf.mxu0
    %688 = vmatprep.mubr.f32.mxu0 0.0
    %689 = vmatmul.mubr.f32.gmra.mxu0 %v589
    %v690 = vpop.f32.mrf.mxu0
    %v691 = vpop.f32.mrf.mxu0
    %692 = vmatprep.mubr.f32.mxu0 0.0
    %693 = vmatmul.mubr.f32.gmra.mxu0 %v590
    %v694 = vpop.f32.mrf.mxu0
    %v695 = vpop.f32.mrf.mxu0
    %696 = vmatprep.mubr.f32.mxu0 0.0
    %697 = vmatmul.mubr.f32.gmra.mxu0 %v591
    %v698 = vpop.f32.mrf.mxu0
    %v699 = vpop.f32.mrf.mxu0
    %700 = vmatprep.mubr.f32.mxu0 0.0
    %701 = vmatmul.mubr.f32.gmra.mxu0 %v592
    %v702 = vpop.f32.mrf.mxu0
    %v703 = vpop.f32.mrf.mxu0
    %704 = vmatprep.mubr.f32.mxu0 0.0
    %705 = vmatmul.mubr.f32.gmra.mxu0 %v593
    %v706 = vpop.f32.mrf.mxu0
    %v707 = vpop.f32.mrf.mxu0
    %708 = vmatprep.mubr.f32.mxu0 0.0
    %709 = vmatmul.mubr.f32.gmra.mxu0 %v594
    %v710 = vpop.f32.mrf.mxu0
    %v711 = vpop.f32.mrf.mxu0
    %712 = vmatprep.mubr.f32.mxu0 0.0
    %713 = vmatmul.mubr.f32.gmra.mxu0 %v595
    %v714 = vpop.f32.mrf.mxu0
    %v715 = vpop.f32.mrf.mxu0
    %716 = vmatprep.mubr.f32.mxu0 0.0
    %717 = vmatmul.mubr.f32.gmra.mxu0 %v596
    %v718 = vpop.f32.mrf.mxu0
    %v719 = vpop.f32.mrf.mxu0
    %720 = vmatprep.mubr.f32.mxu0 0.0
    %721 = vmatmul.mubr.f32.gmra.mxu0 %v597
    %v722 = vpop.f32.mrf.mxu0
    %v723 = vpop.f32.mrf.mxu0
    %724 = vmatprep.mubr.f32.mxu0 0.0
    %725 = vmatmul.mubr.f32.gmra.mxu0 %v598
    %v726 = vpop.f32.mrf.mxu0
    %v727 = vpop.f32.mrf.mxu0
    %728 = vdwg.mxu0
    %729 = vset.pattern.permute.xlu0 4
    %730 = vperm.xlu0 %729, %v29
    %v731 = vpop.permute.xlu0 %730
    %v733 = vadd.f32 %v666, %v731
    %734 = vst [vmem:[%s3] sm:$0xff] %v733
    // Predicated region
    $region18: #{net_forward.1} parent=1 // pred_check
      _
    $region19: #{net_forward.1} parent=1 // pred_check_branch
      %736 = sbr.rel (0) target = $region21
    $region20: #{net_forward.1} parent=1 // pred_region
      _
    $region21: #{net_forward.1} parent=1 // pred_fallthru
      _
    // Predicated region
    $region22: #{net_forward.1} parent=1 // pred_check
      _
    $region23: #{net_forward.1} parent=1 // pred_check_branch
      %738 = sbr.rel (0) target = $region25
    $region24: #{net_forward.1} parent=1 // pred_region
      _
    $region25: #{net_forward.1} parent=1 // pred_fallthru
      _
    %739 = vsyncpa [#allocation3], 1

</llo_original>
